<compile_context>
chip_gen: v5e
topology: v5e:2x2
jax: 0.10.0
libtpu: 0.0.40
codegen_flags: <defaults>
</compile_context>

<pallas_src>
import numpy as np
import jax
import jax.numpy as jnp
from jax.experimental import pallas as pl
from jax.experimental.pallas import tpu as pltpu


def _round_up(a, b):
    return (a + b - 1) // b * b


# ---------------------------------------------------------------------------
# Pallas kernel: per row-tile, two plain 2-D MXU dots (time mix, channel mix).
# ---------------------------------------------------------------------------
def _unet_tile_kernel(x_ref, u1t_ref, wct_ref, b2_ref, o_ref):
    u1t = u1t_ref[...]              # (P, L)     resident weight
    wct = wct_ref[...]              # (C, Opad)  resident weight
    b2 = b2_ref[...]                # (P, Opad)  resident bias (f32)
    tm = x_ref.shape[0]             # static block size
    for r in range(tm):             # static unrolled loop over rows of the tile
        xi = x_ref[r].astype(u1t.dtype)                          # (L, C)
        t = jnp.dot(u1t, xi, preferred_element_type=jnp.float32)  # (P, C)
        oi = jnp.dot(t.astype(wct.dtype), wct,
                     preferred_element_type=jnp.float32) + b2     # (P, Opad)
        o_ref[r] = oi.astype(o_ref.dtype)


def _const_block_spec(shape, single_buffered):
    """BlockSpec with a constant index_map; single-buffer it if supported."""
    index_map = lambda i: (0,) * len(shape)
    if single_buffered and hasattr(pl, "Buffered"):
        try:
            return pl.BlockSpec(shape, index_map, pipeline_mode=pl.Buffered(1))
        except Exception:
            pass
    return pl.BlockSpec(shape, index_map)


def fused_unet_matmul(x3d, u1t, woutT, b2, *, max_tm=8):
    """x3d: (M, L, C) f32 -> (M, P, Opad) f32 via the two folded matmuls."""
    M, L, C = x3d.shape
    P, L2 = u1t.shape
    C2, Opad = woutT.shape
    assert L == L2 and C == C2 and b2.shape == (P, Opad)

    # >= 2 parallel grid steps when possible (v7x has 2 TensorCores).
    TM = 1 if M <= 1 else max(1, min(max_tm, pl.cdiv(M, 2)))
    grid_m = pl.cdiv(M, TM)

    nbytes = lambda a: a.size * a.dtype.itemsize
    flops = 2 * M * (P * L * C + P * C * Opad)
    bytes_accessed = (nbytes(x3d) + nbytes(u1t) + nbytes(woutT) + nbytes(b2)
                      + M * P * Opad * 4)

    def build(single_buffered):
        n_wbuf = 1 if single_buffered else 2
        vmem_budget = (2 * TM * L * C * 4                               # x tiles
                       + n_wbuf * (nbytes(u1t) + nbytes(woutT) + nbytes(b2))
                       + 2 * TM * P * Opad * 4                          # out tiles
                       + (8 << 20))                                     # headroom
        return pl.pallas_call(
            _unet_tile_kernel,
            out_shape=jax.ShapeDtypeStruct((M, P, Opad), jnp.float32),
            grid=(grid_m,),
            in_specs=[
                pl.BlockSpec((TM, L, C), lambda i: (i, 0, 0)),
                _const_block_spec((P, L), single_buffered),
                _const_block_spec((C, Opad), single_buffered),
                _const_block_spec((P, Opad), single_buffered),
            ],
            out_specs=pl.BlockSpec((TM, P, Opad), lambda i: (i, 0, 0)),
            compiler_params=pltpu.CompilerParams(
                dimension_semantics=("parallel",),
                vmem_limit_bytes=int(min(vmem_budget, 100 << 20))),
            cost_estimate=pl.CostEstimate(
                flops=flops, transcendentals=0, bytes_accessed=bytes_accessed),
        )

    try:
        out = build(True)(x3d, u1t, woutT, b2)
        return jax.block_until_ready(out)
    except Exception:
        # Fallback: default double-buffered weight specs.
        return build(False)(x3d, u1t, woutT, b2)


# ---------------------------------------------------------------------------
# Host-side algebraic folding of the (linear) UnetTSF down/up path.
# ---------------------------------------------------------------------------
def avgpool_matrix(L_in):
    """AvgPool2d(kernel=(1,3), stride=(1,2), padding=(0,1),
    count_include_pad=True) over the last dim as an (L_in, L_out) matrix."""
    L_out = (L_in - 1) // 2 + 1
    P = np.zeros((L_in, L_out), dtype=np.float64)
    for j in range(L_out):
        for k in (2 * j - 1, 2 * j, 2 * j + 1):
            if 0 <= k < L_in:
                P[k, j] = 1.0 / 3.0
    return P


def make_params(key, input_channels, out_channels, seq_len, pred_len):
    assert seq_len % 8 == 0, "UnetTSF needs seq_len divisible by 8 (3 pools)."
    filters = [1, 2, 4, 8]
    down_in = [seq_len // f for f in filters]
    down_out = [pred_len // f for f in filters]

    def linear(k, in_f, out_f):
        kw, kb = jax.random.split(k)
        bound = 1.0 / np.sqrt(in_f)
        W = jax.random.uniform(kw, (out_f, in_f), jnp.float32, -bound, bound)
        b = jax.random.uniform(kb, (out_f,), jnp.float32, -bound, bound)
        return W, b

    keys = jax.random.split(key, 8)
    p = {}
    p["W1"], p["b1"] = linear(keys[0], down_in[0], down_out[0])
    p["W2"], p["b2"] = linear(keys[1], down_in[1], down_out[1])
    p["W3"], p["b3"] = linear(keys[2], down_in[2], down_out[2])
    p["W4"], p["b4"] = linear(keys[3], down_in[3], down_out[3])
    p["Wu3"], p["bu3"] = linear(keys[4], down_out[2] + down_out[3], down_out[2])
    p["Wu2"], p["bu2"] = linear(keys[5], down_out[1] + down_out[2], down_out[1])
    p["Wu1"], p["bu1"] = linear(keys[6], down_out[0] + down_out[1], down_out[0])
    p["Wout"], p["bout"] = linear(keys[7], input_channels, out_channels)
    p["down_out"] = down_out
    return p


def fold_params(params, *, input_channels, out_channels, seq_len, pred_len,
                weight_dtype=jnp.float32, lane_multiple=128):
    """Fold down/avgpool/up path into U1 (L,P) + c1 (P,), keep linear_out as a
    separate (C, Opad) matmul. out_channels is zero-padded to `lane_multiple`
    so the kernel's output stores are lane-dense. Folding is f64 on host."""
    D0, D1, D2, D3 = params["down_out"]
    f64 = lambda a: np.asarray(a, dtype=np.float64)

    P1 = avgpool_matrix(seq_len)
    P2 = avgpool_matrix(P1.shape[1])
    P3 = avgpool_matrix(P2.shape[1])

    # composite down maps: seq_len -> down_out[i]
    E1 = f64(params["W1"]).T
    E2 = P1 @ f64(params["W2"]).T
    E3 = P1 @ P2 @ f64(params["W3"]).T
    E4 = P1 @ P2 @ P3 @ f64(params["W4"]).T

    # cat + Linear == split-weight sum
    Wu3T, Wu2T, Wu1T = (f64(params["Wu3"]).T, f64(params["Wu2"]).T,
                        f64(params["Wu1"]).T)
    wu3a, wu3b = Wu3T[:D2], Wu3T[D2:]
    wu2a, wu2b = Wu2T[:D1], Wu2T[D1:]
    wu1a, wu1b = Wu1T[:D0], Wu1T[D0:]
    b1, b2, b3, b4 = (f64(params["b1"]), f64(params["b2"]),
                      f64(params["b3"]), f64(params["b4"]))
    bu3, bu2, bu1 = f64(params["bu3"]), f64(params["bu2"]), f64(params["bu1"])

    U3 = E3 @ wu3a + E4 @ wu3b
    c3 = b3 @ wu3a + b4 @ wu3b + bu3
    U2 = E2 @ wu2a + U3 @ wu2b
    c2 = b2 @ wu2a + c3 @ wu2b + bu2
    U1 = E1 @ wu1a + U2 @ wu1b          # (seq_len, pred_len)
    c1 = b1 @ wu1a + c2 @ wu1b + bu1    # (pred_len,)

    # Channel-mixing linear_out kept separate (no Kronecker blow-up).
    Wout = f64(params["Wout"])          # (O, C)
    bout = f64(params["bout"])          # (O,)
    O = out_channels
    Opad = _round_up(O, lane_multiple)

    WoutT_pad = np.zeros((input_channels, Opad), dtype=np.float64)
    WoutT_pad[:, :O] = Wout.T
    B2_pad = np.zeros((pred_len, Opad), dtype=np.float64)
    B2_pad[:, :O] = c1[:, None] * Wout.sum(axis=1)[None, :] + bout[None, :]

    return {
        "u1t": jnp.asarray(U1.T, dtype=weight_dtype),        # (P, L)
        "woutT": jnp.asarray(WoutT_pad, dtype=weight_dtype),  # (C, Opad)
        "b2": jnp.asarray(B2_pad, dtype=jnp.float32),         # (P, Opad)
        "out_channels": O,
        "out_channels_padded": Opad,
        "pred_len": pred_len,
    }


def unet_tsf_forward(x, folded, *, force_pallas=False,
                     min_flops_for_pallas=1 << 26):
    """x: (B, H, seq_len, C) float32 -> (B, H, pred_len, out_channels)."""
    B, H, L, C = x.shape
    u1t, woutT, b2 = folded["u1t"], folded["woutT"], folded["b2"]
    P = folded["pred_len"]
    O, Opad = folded["out_channels"], folded["out_channels_padded"]
    assert u1t.shape == (P, L) and woutT.shape[0] == C

    M = B * H
    # Pure reshape (no transpose / extra HBM traffic): (L, C) already trailing.
    x3d = x.reshape(M, L, C).astype(jnp.float32)

    flops = 2 * M * (P * L * C + P * C * Opad)
    if force_pallas or flops >= min_flops_for_pallas:
        out_pad = fused_unet_matmul(x3d, u1t, woutT, b2)
    else:
        # Tiny problem: plain XLA beats any single-step Pallas launch.
        t = jnp.einsum("mlc,pl->mpc", x3d, u1t.astype(jnp.float32))
        out_pad = t @ woutT.astype(jnp.float32) + b2

    if Opad != O:
        out_pad = out_pad[..., :O]
    return out_pad.reshape(B, H, P, O)


# ---------------------------------------------------------------------------
# Pure-JAX reference (mirrors the PyTorch forward exactly, incl. torch.cat)
# ---------------------------------------------------------------------------
def reference_forward(x, params):
    hp = jax.lax.Precision.HIGHEST

    def lin(z, W, b):
        return jnp.einsum("...i,oi->...o", z, W, precision=hp) + b

    def avgpool(z):  # AvgPool2d((1,3),(1,2),(0,1)), count_include_pad=True
        zp = jnp.pad(z, ((0, 0), (0, 0), (0, 0), (1, 1)))
        Lo = (z.shape[-1] - 1) // 2 + 1
        idx = jnp.arange(Lo) * 2
        return (zp[..., idx] + zp[..., idx + 1] + zp[..., idx + 2]) / 3.0

    x1 = jnp.transpose(x, (0, 3, 1, 2))
    e1 = lin(x1, params["W1"], params["b1"])
    x2 = avgpool(x1); e2 = lin(x2, params["W2"], params["b2"])
    x3 = avgpool(x2); e3 = lin(x3, params["W3"], params["b3"])
    x4 = avgpool(x3); e4 = lin(x4, params["W4"], params["b4"])
    d3 = lin(jnp.concatenate([e3, e4], -1), params["Wu3"], params["bu3"])
    d2 = lin(jnp.concatenate([e2, d3], -1), params["Wu2"], params["bu2"])
    out = lin(jnp.concatenate([e1, d2], -1), params["Wu1"], params["bu1"])
    out = jnp.transpose(out, (0, 2, 3, 1))
    return lin(out, params["Wout"], params["bout"])


# ---------------------------------------------------------------------------
if __name__ == "__main__":
    input_channels = 4
    out_channels = 4
    seq_len = 16
    pred_len = 16
    B, H = 2, 4

    key = jax.random.PRNGKey(0)
    k_x, k_p = jax.random.split(key)
    x = jax.random.normal(k_x, (B, H, seq_len, input_channels), jnp.float32)
    params = make_params(k_p, input_channels, out_channels, seq_len, pred_len)
    folded = fold_params(params, input_channels=input_channels,
                         out_channels=out_channels,
                         seq_len=seq_len, pred_len=pred_len,
                         weight_dtype=jnp.float32)  # bf16 optional (see notes)

    # force_pallas=True so the Pallas kernel is exercised at this toy size.
    out = unet_tsf_forward(x, folded, force_pallas=True)
    out = jax.block_until_ready(out)

    ref = jax.block_until_ready(reference_forward(x, params))
    assert out.shape == (B, H, pred_len, out_channels), out.shape
    np.testing.assert_allclose(np.asarray(out), np.asarray(ref),
                               rtol=1e-4, atol=1e-5)

    print("KERNEL_OK")
</pallas_src>

<mosaic_0001>
module attributes {stable_mosaic.version = 11 : i64} {
  func.func @_unet_tile_kernel(%arg0: i32, %arg1: memref<4x16x4xf32, #tpu.memory_space<vmem>>, %arg2: memref<16x16xf32, #tpu.memory_space<vmem>>, %arg3: memref<4x128xf32, #tpu.memory_space<vmem>>, %arg4: memref<16x128xf32, #tpu.memory_space<vmem>>, %arg5: memref<4x16x128xf32, #tpu.memory_space<vmem>>) attributes {dimension_semantics = [#tpu.dimension_semantics<parallel>], iteration_bounds = array<i64: 2>, scalar_prefetch = 0 : i64, scratch_operands = 0 : i64, tpu.core_type = #tpu.core_type<tc>, window_params = [{transform_indices = @transform_0, window_bounds = array<i64: 4, 16, 4>}, {pipeline_mode = #tpu.pipeline_mode<synchronous>, transform_indices = @transform_1, window_bounds = array<i64: 16, 16>}, {pipeline_mode = #tpu.pipeline_mode<synchronous>, transform_indices = @transform_2, window_bounds = array<i64: 4, 128>}, {pipeline_mode = #tpu.pipeline_mode<synchronous>, transform_indices = @transform_3, window_bounds = array<i64: 16, 128>}, {transform_indices = @transform_4, window_bounds = array<i64: 4, 16, 128>}]} {
    %c0 = arith.constant 0 : index
    %c0_0 = arith.constant 0 : index
    %0 = vector.load %arg2[%c0, %c0_0] : memref<16x16xf32, #tpu.memory_space<vmem>>, vector<16x16xf32>
    %c0_1 = arith.constant 0 : index
    %c0_2 = arith.constant 0 : index
    %1 = vector.load %arg3[%c0_1, %c0_2] : memref<4x128xf32, #tpu.memory_space<vmem>>, vector<4x128xf32>
    %c0_3 = arith.constant 0 : index
    %c0_4 = arith.constant 0 : index
    %2 = vector.load %arg4[%c0_3, %c0_4] : memref<16x128xf32, #tpu.memory_space<vmem>>, vector<16x128xf32>
    %c0_5 = arith.constant 0 : index
    %c0_6 = arith.constant 0 : index
    %c0_7 = arith.constant 0 : index
    %3 = vector.load %arg1[%c0_5, %c0_6, %c0_7] : memref<4x16x4xf32, #tpu.memory_space<vmem>>, vector<1x16x4xf32>
    %4 = vector.shape_cast %3 : vector<1x16x4xf32> to vector<16x4xf32>
    %cst = arith.constant dense<0.000000e+00> : vector<16x4xf32>
    %5 = tpu.matmul %0, %4, %cst {dimension_numbers = #tpu.dot_dimension_numbers<[1], [0], [0], [1], [0, 0, 1, 1], [], []>} : vector<16x16xf32>, vector<16x4xf32>, vector<16x4xf32> -> vector<16x4xf32>
    %cst_8 = arith.constant dense<0.000000e+00> : vector<16x128xf32>
    %6 = tpu.matmul %5, %1, %cst_8 {dimension_numbers = #tpu.dot_dimension_numbers<[1], [0], [0], [1], [0, 0, 1, 1], [], []>} : vector<16x4xf32>, vector<4x128xf32>, vector<16x128xf32> -> vector<16x128xf32>
    %7 = arith.addf %6, %2 : vector<16x128xf32>
    %c0_9 = arith.constant 0 : index
    %c0_10 = arith.constant 0 : index
    %c0_11 = arith.constant 0 : index
    %8 = vector.load %arg5[%c0_9, %c0_10, %c0_11] : memref<4x16x128xf32, #tpu.memory_space<vmem>>, vector<1x16x128xf32>
    %9 = vector.shape_cast %8 : vector<1x16x128xf32> to vector<16x128xf32>
    %10 = vector.shape_cast %7 : vector<16x128xf32> to vector<1x16x128xf32>
    tpu.vector_store %arg5[%c0_9, %c0_10, %c0_11], %10 {strides = array<i32>} : memref<4x16x128xf32, #tpu.memory_space<vmem>>, vector<1x16x128xf32>,
    %c1 = arith.constant 1 : index
    %c0_12 = arith.constant 0 : index
    %c0_13 = arith.constant 0 : index
    %11 = vector.load %arg1[%c1, %c0_12, %c0_13] : memref<4x16x4xf32, #tpu.memory_space<vmem>>, vector<1x16x4xf32>
    %12 = vector.shape_cast %11 : vector<1x16x4xf32> to vector<16x4xf32>
    %cst_14 = arith.constant dense<0.000000e+00> : vector<16x4xf32>
    %13 = tpu.matmul %0, %12, %cst_14 {dimension_numbers = #tpu.dot_dimension_numbers<[1], [0], [0], [1], [0, 0, 1, 1], [], []>} : vector<16x16xf32>, vector<16x4xf32>, vector<16x4xf32> -> vector<16x4xf32>
    %cst_15 = arith.constant dense<0.000000e+00> : vector<16x128xf32>
    %14 = tpu.matmul %13, %1, %cst_15 {dimension_numbers = #tpu.dot_dimension_numbers<[1], [0], [0], [1], [0, 0, 1, 1], [], []>} : vector<16x4xf32>, vector<4x128xf32>, vector<16x128xf32> -> vector<16x128xf32>
    %15 = arith.addf %14, %2 : vector<16x128xf32>
    %c1_16 = arith.constant 1 : index
    %c0_17 = arith.constant 0 : index
    %c0_18 = arith.constant 0 : index
    %16 = vector.load %arg5[%c1_16, %c0_17, %c0_18] : memref<4x16x128xf32, #tpu.memory_space<vmem>>, vector<1x16x128xf32>
    %17 = vector.shape_cast %16 : vector<1x16x128xf32> to vector<16x128xf32>
    %18 = vector.shape_cast %15 : vector<16x128xf32> to vector<1x16x128xf32>
    tpu.vector_store %arg5[%c1_16, %c0_17, %c0_18], %18 {strides = array<i32>} : memref<4x16x128xf32, #tpu.memory_space<vmem>>, vector<1x16x128xf32>,
    %c2 = arith.constant 2 : index
    %c0_19 = arith.constant 0 : index
    %c0_20 = arith.constant 0 : index
    %19 = vector.load %arg1[%c2, %c0_19, %c0_20] : memref<4x16x4xf32, #tpu.memory_space<vmem>>, vector<1x16x4xf32>
    %20 = vector.shape_cast %19 : vector<1x16x4xf32> to vector<16x4xf32>
    %cst_21 = arith.constant dense<0.000000e+00> : vector<16x4xf32>
    %21 = tpu.matmul %0, %20, %cst_21 {dimension_numbers = #tpu.dot_dimension_numbers<[1], [0], [0], [1], [0, 0, 1, 1], [], []>} : vector<16x16xf32>, vector<16x4xf32>, vector<16x4xf32> -> vector<16x4xf32>
    %cst_22 = arith.constant dense<0.000000e+00> : vector<16x128xf32>
    %22 = tpu.matmul %21, %1, %cst_22 {dimension_numbers = #tpu.dot_dimension_numbers<[1], [0], [0], [1], [0, 0, 1, 1], [], []>} : vector<16x4xf32>, vector<4x128xf32>, vector<16x128xf32> -> vector<16x128xf32>
    %23 = arith.addf %22, %2 : vector<16x128xf32>
    %c2_23 = arith.constant 2 : index
    %c0_24 = arith.constant 0 : index
    %c0_25 = arith.constant 0 : index
    %24 = vector.load %arg5[%c2_23, %c0_24, %c0_25] : memref<4x16x128xf32, #tpu.memory_space<vmem>>, vector<1x16x128xf32>
    %25 = vector.shape_cast %24 : vector<1x16x128xf32> to vector<16x128xf32>
    %26 = vector.shape_cast %23 : vector<16x128xf32> to vector<1x16x128xf32>
    tpu.vector_store %arg5[%c2_23, %c0_24, %c0_25], %26 {strides = array<i32>} : memref<4x16x128xf32, #tpu.memory_space<vmem>>, vector<1x16x128xf32>,
    %c3 = arith.constant 3 : index
    %c0_26 = arith.constant 0 : index
    %c0_27 = arith.constant 0 : index
    %27 = vector.load %arg1[%c3, %c0_26, %c0_27] : memref<4x16x4xf32, #tpu.memory_space<vmem>>, vector<1x16x4xf32>
    %28 = vector.shape_cast %27 : vector<1x16x4xf32> to vector<16x4xf32>
    %cst_28 = arith.constant dense<0.000000e+00> : vector<16x4xf32>
    %29 = tpu.matmul %0, %28, %cst_28 {dimension_numbers = #tpu.dot_dimension_numbers<[1], [0], [0], [1], [0, 0, 1, 1], [], []>} : vector<16x16xf32>, vector<16x4xf32>, vector<16x4xf32> -> vector<16x4xf32>
    %cst_29 = arith.constant dense<0.000000e+00> : vector<16x128xf32>
    %30 = tpu.matmul %29, %1, %cst_29 {dimension_numbers = #tpu.dot_dimension_numbers<[1], [0], [0], [1], [0, 0, 1, 1], [], []>} : vector<16x4xf32>, vector<4x128xf32>, vector<16x128xf32> -> vector<16x128xf32>
    %31 = arith.addf %30, %2 : vector<16x128xf32>
    %c3_30 = arith.constant 3 : index
    %c0_31 = arith.constant 0 : index
    %c0_32 = arith.constant 0 : index
    %32 = vector.load %arg5[%c3_30, %c0_31, %c0_32] : memref<4x16x128xf32, #tpu.memory_space<vmem>>, vector<1x16x128xf32>
    %33 = vector.shape_cast %32 : vector<1x16x128xf32> to vector<16x128xf32>
    %34 = vector.shape_cast %31 : vector<16x128xf32> to vector<1x16x128xf32>
    tpu.vector_store %arg5[%c3_30, %c0_31, %c0_32], %34 {strides = array<i32>} : memref<4x16x128xf32, #tpu.memory_space<vmem>>, vector<1x16x128xf32>,
    return
  }
  func.func @transform_0(%arg0: i32) -> (i32, i32, i32) {
    %c0_i32 = arith.constant 0 : i32
    %c0_i32_0 = arith.constant 0 : i32
    %c0_i32_1 = arith.constant 0 : i32
    return %arg0, %c0_i32, %c0_i32_0 : i32, i32, i32
  }
  func.func @transform_1(%arg0: i32) -> (i32, i32) {
    %c0_i32 = arith.constant 0 : i32
    %c0_i32_0 = arith.constant 0 : i32
    %c0_i32_1 = arith.constant 0 : i32
    return %c0_i32, %c0_i32_0 : i32, i32
  }
  func.func @transform_2(%arg0: i32) -> (i32, i32) {
    %c0_i32 = arith.constant 0 : i32
    %c0_i32_0 = arith.constant 0 : i32
    %c0_i32_1 = arith.constant 0 : i32
    return %c0_i32, %c0_i32_0 : i32, i32
  }
  func.func @transform_3(%arg0: i32) -> (i32, i32) {
    %c0_i32 = arith.constant 0 : i32
    %c0_i32_0 = arith.constant 0 : i32
    %c0_i32_1 = arith.constant 0 : i32
    return %c0_i32, %c0_i32_0 : i32, i32
  }
  func.func @transform_4(%arg0: i32) -> (i32, i32, i32) {
    %c0_i32 = arith.constant 0 : i32
    %c0_i32_0 = arith.constant 0 : i32
    %c0_i32_1 = arith.constant 0 : i32
    return %arg0, %c0_i32, %c0_i32_0 : i32, i32, i32
  }
}

module attributes {stable_mosaic.version = 11 : i64} {
  func.func @_unet_tile_kernel(%arg0: i32, %arg1: memref<4x16x4xf32, #tpu.memory_space<vmem>>, %arg2: memref<16x16xf32, #tpu.memory_space<vmem>>, %arg3: memref<4x128xf32, #tpu.memory_space<vmem>>, %arg4: memref<16x128xf32, #tpu.memory_space<vmem>>, %arg5: memref<4x16x128xf32, #tpu.memory_space<vmem>>) attributes {dimension_semantics = [#tpu.dimension_semantics<parallel>], iteration_bounds = array<i64: 2>, scalar_prefetch = 0 : i64, scratch_operands = 0 : i64, tpu.core_type = #tpu.core_type<tc>, window_params = [{transform_indices = @transform_0, window_bounds = array<i64: 4, 16, 4>}, {pipeline_mode = #tpu.pipeline_mode<synchronous>, transform_indices = @transform_1, window_bounds = array<i64: 16, 16>}, {pipeline_mode = #tpu.pipeline_mode<synchronous>, transform_indices = @transform_2, window_bounds = array<i64: 4, 128>}, {pipeline_mode = #tpu.pipeline_mode<synchronous>, transform_indices = @transform_3, window_bounds = array<i64: 16, 128>}, {transform_indices = @transform_4, window_bounds = array<i64: 4, 16, 128>}]} {
    %c0 = arith.constant 0 : index
    %c0_0 = arith.constant 0 : index
    %0 = vector.load %arg2[%c0, %c0_0] : memref<16x16xf32, #tpu.memory_space<vmem>>, vector<16x16xf32>
    %c0_1 = arith.constant 0 : index
    %c0_2 = arith.constant 0 : index
    %1 = vector.load %arg3[%c0_1, %c0_2] : memref<4x128xf32, #tpu.memory_space<vmem>>, vector<4x128xf32>
    %c0_3 = arith.constant 0 : index
    %c0_4 = arith.constant 0 : index
    %2 = vector.load %arg4[%c0_3, %c0_4] : memref<16x128xf32, #tpu.memory_space<vmem>>, vector<16x128xf32>
    %c0_5 = arith.constant 0 : index
    %c0_6 = arith.constant 0 : index
    %c0_7 = arith.constant 0 : index
    %3 = vector.load %arg1[%c0_5, %c0_6, %c0_7] : memref<4x16x4xf32, #tpu.memory_space<vmem>>, vector<1x16x4xf32>
    %4 = vector.shape_cast %3 : vector<1x16x4xf32> to vector<16x4xf32>
    %cst = arith.constant dense<0.000000e+00> : vector<16x4xf32>
    %5 = tpu.matmul %0, %4, %cst {dimension_numbers = #tpu.dot_dimension_numbers<[1], [0], [0], [1], [0, 0, 1, 1], [], []>} : vector<16x16xf32>, vector<16x4xf32>, vector<16x4xf32> -> vector<16x4xf32>
    %cst_8 = arith.constant dense<0.000000e+00> : vector<16x128xf32>
    %6 = tpu.matmul %5, %1, %cst_8 {dimension_numbers = #tpu.dot_dimension_numbers<[1], [0], [0], [1], [0, 0, 1, 1], [], []>} : vector<16x4xf32>, vector<4x128xf32>, vector<16x128xf32> -> vector<16x128xf32>
    %7 = arith.addf %6, %2 : vector<16x128xf32>
    %c0_9 = arith.constant 0 : index
    %c0_10 = arith.constant 0 : index
    %c0_11 = arith.constant 0 : index
    %8 = vector.load %arg5[%c0_9, %c0_10, %c0_11] : memref<4x16x128xf32, #tpu.memory_space<vmem>>, vector<1x16x128xf32>
    %9 = vector.shape_cast %8 : vector<1x16x128xf32> to vector<16x128xf32>
    %10 = vector.shape_cast %7 : vector<16x128xf32> to vector<1x16x128xf32>
    tpu.vector_store %arg5[%c0_9, %c0_10, %c0_11], %10 {strides = array<i32>} : memref<4x16x128xf32, #tpu.memory_space<vmem>>, vector<1x16x128xf32>,
    %c1 = arith.constant 1 : index
    %c0_12 = arith.constant 0 : index
    %c0_13 = arith.constant 0 : index
    %11 = vector.load %arg1[%c1, %c0_12, %c0_13] : memref<4x16x4xf32, #tpu.memory_space<vmem>>, vector<1x16x4xf32>
    %12 = vector.shape_cast %11 : vector<1x16x4xf32> to vector<16x4xf32>
    %cst_14 = arith.constant dense<0.000000e+00> : vector<16x4xf32>
    %13 = tpu.matmul %0, %12, %cst_14 {dimension_numbers = #tpu.dot_dimension_numbers<[1], [0], [0], [1], [0, 0, 1, 1], [], []>} : vector<16x16xf32>, vector<16x4xf32>, vector<16x4xf32> -> vector<16x4xf32>
    %cst_15 = arith.constant dense<0.000000e+00> : vector<16x128xf32>
    %14 = tpu.matmul %13, %1, %cst_15 {dimension_numbers = #tpu.dot_dimension_numbers<[1], [0], [0], [1], [0, 0, 1, 1], [], []>} : vector<16x4xf32>, vector<4x128xf32>, vector<16x128xf32> -> vector<16x128xf32>
    %15 = arith.addf %14, %2 : vector<16x128xf32>
    %c1_16 = arith.constant 1 : index
    %c0_17 = arith.constant 0 : index
    %c0_18 = arith.constant 0 : index
    %16 = vector.load %arg5[%c1_16, %c0_17, %c0_18] : memref<4x16x128xf32, #tpu.memory_space<vmem>>, vector<1x16x128xf32>
    %17 = vector.shape_cast %16 : vector<1x16x128xf32> to vector<16x128xf32>
    %18 = vector.shape_cast %15 : vector<16x128xf32> to vector<1x16x128xf32>
    tpu.vector_store %arg5[%c1_16, %c0_17, %c0_18], %18 {strides = array<i32>} : memref<4x16x128xf32, #tpu.memory_space<vmem>>, vector<1x16x128xf32>,
    %c2 = arith.constant 2 : index
    %c0_19 = arith.constant 0 : index
    %c0_20 = arith.constant 0 : index
    %19 = vector.load %arg1[%c2, %c0_19, %c0_20] : memref<4x16x4xf32, #tpu.memory_space<vmem>>, vector<1x16x4xf32>
    %20 = vector.shape_cast %19 : vector<1x16x4xf32> to vector<16x4xf32>
    %cst_21 = arith.constant dense<0.000000e+00> : vector<16x4xf32>
    %21 = tpu.matmul %0, %20, %cst_21 {dimension_numbers = #tpu.dot_dimension_numbers<[1], [0], [0], [1], [0, 0, 1, 1], [], []>} : vector<16x16xf32>, vector<16x4xf32>, vector<16x4xf32> -> vector<16x4xf32>
    %cst_22 = arith.constant dense<0.000000e+00> : vector<16x128xf32>
    %22 = tpu.matmul %21, %1, %cst_22 {dimension_numbers = #tpu.dot_dimension_numbers<[1], [0], [0], [1], [0, 0, 1, 1], [], []>} : vector<16x4xf32>, vector<4x128xf32>, vector<16x128xf32> -> vector<16x128xf32>
    %23 = arith.addf %22, %2 : vector<16x128xf32>
    %c2_23 = arith.constant 2 : index
    %c0_24 = arith.constant 0 : index
    %c0_25 = arith.constant 0 : index
    %24 = vector.load %arg5[%c2_23, %c0_24, %c0_25] : memref<4x16x128xf32, #tpu.memory_space<vmem>>, vector<1x16x128xf32>
    %25 = vector.shape_cast %24 : vector<1x16x128xf32> to vector<16x128xf32>
    %26 = vector.shape_cast %23 : vector<16x128xf32> to vector<1x16x128xf32>
    tpu.vector_store %arg5[%c2_23, %c0_24, %c0_25], %26 {strides = array<i32>} : memref<4x16x128xf32, #tpu.memory_space<vmem>>, vector<1x16x128xf32>,
    %c3 = arith.constant 3 : index
    %c0_26 = arith.constant 0 : index
    %c0_27 = arith.constant 0 : index
    %27 = vector.load %arg1[%c3, %c0_26, %c0_27] : memref<4x16x4xf32, #tpu.memory_space<vmem>>, vector<1x16x4xf32>
    %28 = vector.shape_cast %27 : vector<1x16x4xf32> to vector<16x4xf32>
    %cst_28 = arith.constant dense<0.000000e+00> : vector<16x4xf32>
    %29 = tpu.matmul %0, %28, %cst_28 {dimension_numbers = #tpu.dot_dimension_numbers<[1], [0], [0], [1], [0, 0, 1, 1], [], []>} : vector<16x16xf32>, vector<16x4xf32>, vector<16x4xf32> -> vector<16x4xf32>
    %cst_29 = arith.constant dense<0.000000e+00> : vector<16x128xf32>
    %30 = tpu.matmul %29, %1, %cst_29 {dimension_numbers = #tpu.dot_dimension_numbers<[1], [0], [0], [1], [0, 0, 1, 1], [], []>} : vector<16x4xf32>, vector<4x128xf32>, vector<16x128xf32> -> vector<16x128xf32>
    %31 = arith.addf %30, %2 : vector<16x128xf32>
    %c3_30 = arith.constant 3 : index
    %c0_31 = arith.constant 0 : index
    %c0_32 = arith.constant 0 : index
    %32 = vector.load %arg5[%c3_30, %c0_31, %c0_32] : memref<4x16x128xf32, #tpu.memory_space<vmem>>, vector<1x16x128xf32>
    %33 = vector.shape_cast %32 : vector<1x16x128xf32> to vector<16x128xf32>
    %34 = vector.shape_cast %31 : vector<16x128xf32> to vector<1x16x128xf32>
    tpu.vector_store %arg5[%c3_30, %c0_31, %c0_32], %34 {strides = array<i32>} : memref<4x16x128xf32, #tpu.memory_space<vmem>>, vector<1x16x128xf32>,
    return
  }
  func.func @transform_0(%arg0: i32) -> (i32, i32, i32) {
    %c0_i32 = arith.constant 0 : i32
    %c0_i32_0 = arith.constant 0 : i32
    %c0_i32_1 = arith.constant 0 : i32
    return %arg0, %c0_i32, %c0_i32_0 : i32, i32, i32
  }
  func.func @transform_1(%arg0: i32) -> (i32, i32) {
    %c0_i32 = arith.constant 0 : i32
    %c0_i32_0 = arith.constant 0 : i32
    %c0_i32_1 = arith.constant 0 : i32
    return %c0_i32, %c0_i32_0 : i32, i32
  }
  func.func @transform_2(%arg0: i32) -> (i32, i32) {
    %c0_i32 = arith.constant 0 : i32
    %c0_i32_0 = arith.constant 0 : i32
    %c0_i32_1 = arith.constant 0 : i32
    return %c0_i32, %c0_i32_0 : i32, i32
  }
  func.func @transform_3(%arg0: i32) -> (i32, i32) {
    %c0_i32 = arith.constant 0 : i32
    %c0_i32_0 = arith.constant 0 : i32
    %c0_i32_1 = arith.constant 0 : i32
    return %c0_i32, %c0_i32_0 : i32, i32
  }
  func.func @transform_4(%arg0: i32) -> (i32, i32, i32) {
    %c0_i32 = arith.constant 0 : i32
    %c0_i32_0 = arith.constant 0 : i32
    %c0_i32_1 = arith.constant 0 : i32
    return %arg0, %c0_i32, %c0_i32_0 : i32, i32, i32
  }
}

</mosaic_0001>

<llo_original>
// kernel: tpu_custom_call.1
$region0: #{tpu_custom_call.1}
  #allocation0 [shape = 'u32[]', space=smem, size = 0x4, offset = 0x4, fixed_abs, tag = 'smem constant byte address 0x4 - core index']
  #allocation1 [shape = 'u32[72,128]{1,0:T(1,128)}', space=vmem, size = 0x9000, scoped, tag = 'internal scratch']
  %s0 = inlined_call_operand.vmem [shape: f32[8,16,4], index: 0, kind: input, shape index: {}]
  %s1 = inlined_call_operand.vmem [shape: f32[16,16], index: 1, kind: input, shape index: {}]
  %s2 = inlined_call_operand.vmem [shape: f32[4,128], index: 2, kind: input, shape index: {}]
  %s3 = inlined_call_operand.vmem [shape: f32[16,128], index: 3, kind: input, shape index: {}]
  %s4 = inlined_call_operand.hbm [shape: f32[8,16,128], index: 4, kind: output, shape index: {}]
  %s5 = sld [smem:[#allocation0]]
  $region49: #{tpu_custom_call.1} parent=0
    _
  %s7 = ssub.s32 1, %s5
  %s8 = scalar_select 0, %s7, %s5
  $region1: #{tpu_custom_call.1} parent=0
    #allocation2 [shape = 'u8[65536]{0}', space=vmem, size = 0x10000, scoped, tag = 'output window, operand 0']
    #allocation3 [shape = 's32[2]{0}', space=sflag, size = 0x8, scoped, tag = 'scoped memory for tpu_custom_call.1']
    %9 = vsyncpa [#allocation3], 0
    %s10 = scalar_lea.sflag [#allocation3], 1
    %11 = vsyncpa %s10, 0
    loop: start=0, step=1, limit=4
    $region2: #{tpu_custom_call.1} parent=1 // loop_pre_header
      _
    $region3: #{tpu_custom_call.1} parent=1 // loop_header
      %s13 = sphi 0, %s17
      %p14 = scmp.ge.s32.totalorder %s13, 4
      %s23 = sphi 0, %s25
      %s26 = sphi 0, %s23
      %s27 = sphi 0, %s26
      %s43 = sphi 0, %s27
      %s47 = sphi 0, %s47
      %s49 = sphi 0, %s47
      %s50 = sphi 0, %s49
      %s64 = sphi 0, %s50
      %s68 = sphi 0, %s68
      %s70 = sphi 0, %s68
      %s71 = sphi 0, %s70
      %s85 = sphi 0, %s71
      %s89 = sphi 0, %s89
      %s91 = sphi 0, %s89
      %s92 = sphi 0, %s91
      %s106 = sphi 0, %s92
      %s112 = sphi 0, %s114
      %s115 = sphi 0, %s112
      %s116 = sphi 0, %s115
      %s132 = sphi 0, %s116
    $region4: #{tpu_custom_call.1} parent=1 // loop_header_branch
      %16 = sbr.rel (%p14) target = $region8
    $region5: #{tpu_custom_call.1} parent=1 // loop_body
      %s18 = ssub.s32 %s13, 1
      %s19 = ssub.s32 %s13, 2
      %s20 = sadd.s32 %s13, 1
      %s21 = ssub.s32 %s13, %s20
      %p22 = scmp.eq.s32.totalorder %s21, 0
      %s24 = sadd.s32 %s23, 1
      %s25 = scalar_select %p22, %s23, %s24
      %p28 = pneg %p22
      %p29 = scmp.eq.s32.totalorder %s13, 1
      %p30 = por %p28, %p29
      %p31 = scmp.ne.s32.totalorder %s23, %s26
      %p32 = scmp.eq.s32.totalorder %s13, 0
      %p33 = por %p31, %p32
      %p34 = scmp.ne.s32.totalorder %s23, %s26
      %p35 = scmp.eq.s32.totalorder %s18, 1
      %p36 = por %p34, %p35
      %p37 = scmp.ne.s32.totalorder %s26, %s27
      %p38 = scmp.eq.s32.totalorder %s18, 0
      %p39 = por %p37, %p38
      %p40 = scmp.ne.s32.totalorder %s26, %s27
      %p41 = scmp.eq.s32.totalorder %s19, 1
      %p42 = por %p40, %p41
      %p44 = scmp.ne.s32.totalorder %s27, %s43
      %p45 = scmp.eq.s32.totalorder %s19, 0
      %p46 = por %p44, %p45
      %s48 = sadd.s32 %s47, 1
      %p51 = scmp.eq.s32.totalorder %s13, 1
      %p52 = scmp.ne.s32.totalorder %s47, %s49
      %p53 = scmp.eq.s32.totalorder %s13, 0
      %p54 = por %p52, %p53
      %p55 = scmp.ne.s32.totalorder %s47, %s49
      %p56 = scmp.eq.s32.totalorder %s18, 1
      %p57 = por %p55, %p56
      %p58 = scmp.ne.s32.totalorder %s49, %s50
      %p59 = scmp.eq.s32.totalorder %s18, 0
      %p60 = por %p58, %p59
      %p61 = scmp.ne.s32.totalorder %s49, %s50
      %p62 = scmp.eq.s32.totalorder %s19, 1
      %p63 = por %p61, %p62
      %p65 = scmp.ne.s32.totalorder %s50, %s64
      %p66 = scmp.eq.s32.totalorder %s19, 0
      %p67 = por %p65, %p66
      %s69 = sadd.s32 %s68, 1
      %p72 = scmp.eq.s32.totalorder %s13, 1
      %p73 = scmp.ne.s32.totalorder %s68, %s70
      %p74 = scmp.eq.s32.totalorder %s13, 0
      %p75 = por %p73, %p74
      %p76 = scmp.ne.s32.totalorder %s68, %s70
      %p77 = scmp.eq.s32.totalorder %s18, 1
      %p78 = por %p76, %p77
      %p79 = scmp.ne.s32.totalorder %s70, %s71
      %p80 = scmp.eq.s32.totalorder %s18, 0
      %p81 = por %p79, %p80
      %p82 = scmp.ne.s32.totalorder %s70, %s71
      %p83 = scmp.eq.s32.totalorder %s19, 1
      %p84 = por %p82, %p83
      %p86 = scmp.ne.s32.totalorder %s71, %s85
      %p87 = scmp.eq.s32.totalorder %s19, 0
      %p88 = por %p86, %p87
      %s90 = sadd.s32 %s89, 1
      %p93 = scmp.eq.s32.totalorder %s13, 1
      %p94 = scmp.ne.s32.totalorder %s89, %s91
      %p95 = scmp.eq.s32.totalorder %s13, 0
      %p96 = por %p94, %p95
      %p97 = scmp.ne.s32.totalorder %s89, %s91
      %p98 = scmp.eq.s32.totalorder %s18, 1
      %p99 = por %p97, %p98
      %p100 = scmp.ne.s32.totalorder %s91, %s92
      %p101 = scmp.eq.s32.totalorder %s18, 0
      %p102 = por %p100, %p101
      %p103 = scmp.ne.s32.totalorder %s91, %s92
      %p104 = scmp.eq.s32.totalorder %s19, 1
      %p105 = por %p103, %p104
      %p107 = scmp.ne.s32.totalorder %s92, %s106
      %p108 = scmp.eq.s32.totalorder %s19, 0
      %p109 = por %p107, %p108
      %s110 = ssub.s32 %s13, %s20
      %p111 = scmp.eq.s32.totalorder %s110, 0
      %s113 = sadd.s32 %s112, 1
      %s114 = scalar_select %p111, %s112, %s113
      %p117 = pneg %p111
      %p118 = scmp.eq.s32.totalorder %s13, 1
      %p119 = por %p117, %p118
      %p120 = scmp.ne.s32.totalorder %s112, %s115
      %p121 = scmp.eq.s32.totalorder %s13, 0
      %p122 = por %p120, %p121
      %p123 = scmp.ne.s32.totalorder %s112, %s115
      %p124 = scmp.eq.s32.totalorder %s18, 1
      %p125 = por %p123, %p124
      %p126 = scmp.ne.s32.totalorder %s115, %s116
      %p127 = scmp.eq.s32.totalorder %s18, 0
      %p128 = por %p126, %p127
      %p129 = scmp.ne.s32.totalorder %s115, %s116
      %p130 = scmp.eq.s32.totalorder %s19, 1
      %p131 = por %p129, %p130
      %p133 = scmp.ne.s32.totalorder %s116, %s132
      %p134 = scmp.eq.s32.totalorder %s19, 0
      %p135 = por %p133, %p134
      %p136 = scmp.le.s32.totalorder 1, %s13
      %p137 = scmp.lt.s32.totalorder %s13, 3
      %p138 = pnand %p136, %p137
      %p139 = pneg %p138
      // Predicated region
      $region9: #{tpu_custom_call.1} parent=5 // pred_check
        _
      $region10: #{tpu_custom_call.1} parent=5 // pred_check_branch
        %141 = sbr.rel (%p138) target = $region12
      $region11: #{tpu_custom_call.1} parent=5 // pred_region
        %s142 = ssub.s32 %s13, 1
        // Predicated region
        $region13: #{tpu_custom_call.1} parent=11 // pred_check
          %p143 = pneg %p60
        $region14: #{tpu_custom_call.1} parent=11 // pred_check_branch
          %145 = sbr.rel (%p143) target = $region16
        $region15: #{tpu_custom_call.1} parent=11 // pred_region
          _
        $region16: #{tpu_custom_call.1} parent=11 // pred_fallthru
          _
        // Predicated region
        $region17: #{tpu_custom_call.1} parent=11 // pred_check
          %p146 = pneg %p81
        $region18: #{tpu_custom_call.1} parent=11 // pred_check_branch
          %148 = sbr.rel (%p146) target = $region20
        $region19: #{tpu_custom_call.1} parent=11 // pred_region
          _
        $region20: #{tpu_custom_call.1} parent=11 // pred_fallthru
          _
        // Predicated region
        $region21: #{tpu_custom_call.1} parent=11 // pred_check
          %p149 = pneg %p102
        $region22: #{tpu_custom_call.1} parent=11 // pred_check_branch
          %151 = sbr.rel (%p149) target = $region24
        $region23: #{tpu_custom_call.1} parent=11 // pred_region
          _
        $region24: #{tpu_custom_call.1} parent=11 // pred_fallthru
          _
      $region12: #{tpu_custom_call.1} parent=5 // pred_fallthru
        _
      %p152 = scmp.lt.s32.totalorder %s13, 2
      // Predicated region
      $region25: #{tpu_custom_call.1} parent=5 // pred_check
        %p153 = pneg %p152
      $region26: #{tpu_custom_call.1} parent=5 // pred_check_branch
        %155 = sbr.rel (%p153) target = $region28
      $region27: #{tpu_custom_call.1} parent=5 // pred_region
        // Predicated region
        $region29: #{tpu_custom_call.1} parent=27 // pred_check
          %p156 = pneg %p33
        $region30: #{tpu_custom_call.1} parent=27 // pred_check_branch
          %158 = sbr.rel (%p156) target = $region32
        $region31: #{tpu_custom_call.1} parent=27 // pred_region
          %s159 = smul.u32 4, %s13
          %p160 = scmp.lt.s32.totalorder %s159, 7
          %s161 = scalar_select %p160, %s159, 7
          %s162 = smul.addr %s161, 2
          %s163 = smul.addr %s162, 8
          %s164 = scalar_lea.vmem %s0, %s163
          %s165 = smul.u32 4, %s13
        $region32: #{tpu_custom_call.1} parent=27 // pred_fallthru
          _
      $region28: #{tpu_custom_call.1} parent=5 // pred_fallthru
        _
      %p166 = scmp.le.s32.totalorder 1, %s13
      %p167 = scmp.lt.s32.totalorder %s13, 3
      %p168 = pnand %p166, %p167
      %p169 = pneg %p168
      // Predicated region
      $region33: #{tpu_custom_call.1} parent=5 // pred_check
        _
      $region34: #{tpu_custom_call.1} parent=5 // pred_check_branch
        %171 = sbr.rel (%p168) target = $region36
      $region35: #{tpu_custom_call.1} parent=5 // pred_region
        %s172 = ssub.s32 %s13, 1
        %s173 = smul.u32 4, %s18
        %p174 = scmp.lt.s32.totalorder %s173, 7
        %s175 = scalar_select %p174, %s173, 7
        %s176 = smul.addr %s175, 2
        %s177 = smul.addr %s176, 8
        %s178 = scalar_lea.vmem %s0, %s177
        %p179 = pneg %p39
        %p180 = pneg %p36
        %p181 = pneg %p60
        %p182 = pneg %p57
        %p183 = pneg %p81
        %p184 = pneg %p78
        %p185 = pneg %p102
        %p186 = pneg %p99
        %p187 = pneg %p128
        %p188 = pneg %p125
        %s189 = sand.u32 %s115, 1
        %s190 = scalar_lea.sflag [#allocation3], %s189
        %s191 = sand.u32 %s115, 1
        %s192 = smul.addr %s191, 64
        %s193 = scalar_lea.vmem [#allocation2], %s192
        %s194 = smul.u32 4, %s18
        %p195 = scmp.lt.s32.totalorder %s194, 7
        %s196 = scalar_select %p195, %s194, 7
        %s197 = smul.addr %s196, 2
        %s198 = smul.addr %s197, 8
        %s199 = scalar_lea.vmem %s0, %s198
        %s200 = smul.u32 4, %s18
        %s201 = smul.u32 4, %s18
        %v202 = vld [vmem:[%s1] sm:$0xff]
        %v203 = vld [vmem:[%s1 + $0x8] sm:$0xff]
        %v204 = vld [vmem:[%s2] sm:$0xf]
        %v205 = vld [vmem:[%s3] sm:$0xff]
        %v206 = vld [vmem:[%s3 + $0x8] sm:$0xff]
        %v207 = vld [vmem:[%s199] sm:$0xff]
        %v208 = vld [vmem:[%s199 + $0x8] sm:$0xff]
        %vm209 = vcmask 130048
        %v211 = vsel %vm209, %v202, 0
        %v214 = vsel %vm209, %v203, 0
        %216 = vmatpush.msra.mxu0 0.0
        %217 = vmatpush.msra.mxu0 0.0
        %218 = vmatpush.msra.mxu0 0.0
        %219 = vmatpush.msra.mxu0 0.0
        %220 = vmatpush.msra.mxu0 0.0
        %221 = vmatpush.msra.mxu0 0.0
        %222 = vmatpush.msra.mxu0 0.0
        %223 = vmatpush.msra.mxu0 0.0
        %224 = vmatpush.msra.mxu0 0.0
        %225 = vmatpush.msra.mxu0 0.0
        %226 = vmatpush.msra.mxu0 0.0
        %227 = vmatpush.msra.mxu0 0.0
        %228 = vmatpush.msra.mxu0 0.0
        %229 = vmatpush.msra.mxu0 0.0
        %230 = vmatpush.msra.mxu0 %v208
        %231 = vmatpush.msra.mxu0 %v207
        %232 = vmatmul.f32.gmra.mxu0 %v211
        %v233 = vpop.f32.mrf.mxu0
        %v234 = vadd.f32 0.0, %v233
        %235 = vmatmul.f32.gmra.mxu0 %v214
        %v236 = vpop.f32.mrf.mxu0
        %v237 = vadd.f32 0.0, %v236
        %238 = vdwg.mxu0
        %vm239 = vcmask 31744
        %v241 = vsel %vm239, %v234, 0
        %v244 = vsel %vm239, %v237, 0
        %vm246 = vcmask 1043456
        %v248 = vsel %vm246, %v204, 0
        %250 = vmatpush.msra.mxu0 0.0
        %251 = vmatpush.msra.mxu0 0.0
        %252 = vmatpush.msra.mxu0 0.0
        %253 = vmatpush.msra.mxu0 0.0
        %254 = vmatpush.msra.mxu0 0.0
        %255 = vmatpush.msra.mxu0 0.0
        %256 = vmatpush.msra.mxu0 0.0
        %257 = vmatpush.msra.mxu0 0.0
        %258 = vmatpush.msra.mxu0 0.0
        %259 = vmatpush.msra.mxu0 0.0
        %260 = vmatpush.msra.mxu0 0.0
        %261 = vmatpush.msra.mxu0 0.0
        %262 = vmatpush.msra.mxu0 0.0
        %263 = vmatpush.msra.mxu0 0.0
        %264 = vmatpush.msra.mxu0 0.0
        %265 = vmatpush.msra.mxu0 %v248
        %266 = vmatmul.f32.gmra.mxu0 %v241
        %v267 = vpop.f32.mrf.mxu0
        %v268 = vadd.f32 %v205, %v267
        %269 = vmatmul.f32.gmra.mxu0 %v244
        %v270 = vpop.f32.mrf.mxu0
        %v271 = vadd.f32 %v206, %v270
        %272 = vdwg.mxu0
        %273 = vst [vmem:[%s193] sm:$0xff] %v268
        %274 = vst [vmem:[%s193 + $0x8] sm:$0xff] %v271
        %s275 = scalar_lea.vmem %s199, 16
        %v276 = vld [vmem:[%s275] sm:$0xff]
        %v277 = vld [vmem:[%s275 + $0x8] sm:$0xff]
        %278 = vmatpush.msra.mxu0 0.0
        %279 = vmatpush.msra.mxu0 0.0
        %280 = vmatpush.msra.mxu0 0.0
        %281 = vmatpush.msra.mxu0 0.0
        %282 = vmatpush.msra.mxu0 0.0
        %283 = vmatpush.msra.mxu0 0.0
        %284 = vmatpush.msra.mxu0 0.0
        %285 = vmatpush.msra.mxu0 0.0
        %286 = vmatpush.msra.mxu0 0.0
        %287 = vmatpush.msra.mxu0 0.0
        %288 = vmatpush.msra.mxu0 0.0
        %289 = vmatpush.msra.mxu0 0.0
        %290 = vmatpush.msra.mxu0 0.0
        %291 = vmatpush.msra.mxu0 0.0
        %292 = vmatpush.msra.mxu0 %v277
        %293 = vmatpush.msra.mxu0 %v276
        %294 = vmatmul.f32.gmra.mxu0 %v211
        %v295 = vpop.f32.mrf.mxu0
        %v296 = vadd.f32 0.0, %v295
        %297 = vmatmul.f32.gmra.mxu0 %v214
        %v298 = vpop.f32.mrf.mxu0
        %v299 = vadd.f32 0.0, %v298
        %300 = vdwg.mxu0
        %v302 = vsel %vm239, %v296, 0
        %v305 = vsel %vm239, %v299, 0
        %307 = vmatpush.msra.mxu0 0.0
        %308 = vmatpush.msra.mxu0 0.0
        %309 = vmatpush.msra.mxu0 0.0
        %310 = vmatpush.msra.mxu0 0.0
        %311 = vmatpush.msra.mxu0 0.0
        %312 = vmatpush.msra.mxu0 0.0
        %313 = vmatpush.msra.mxu0 0.0
        %314 = vmatpush.msra.mxu0 0.0
        %315 = vmatpush.msra.mxu0 0.0
        %316 = vmatpush.msra.mxu0 0.0
        %317 = vmatpush.msra.mxu0 0.0
        %318 = vmatpush.msra.mxu0 0.0
        %319 = vmatpush.msra.mxu0 0.0
        %320 = vmatpush.msra.mxu0 0.0
        %321 = vmatpush.msra.mxu0 0.0
        %322 = vmatpush.msra.mxu0 %v248
        %323 = vmatmul.f32.gmra.mxu0 %v302
        %v324 = vpop.f32.mrf.mxu0
        %v325 = vadd.f32 %v205, %v324
        %326 = vmatmul.f32.gmra.mxu0 %v305
        %v327 = vpop.f32.mrf.mxu0
        %v328 = vadd.f32 %v206, %v327
        %329 = vdwg.mxu0
        %s330 = scalar_lea.vmem %s193, 16 [#allocation2]
        %331 = vst [vmem:[%s330] sm:$0xff] %v325
        %332 = vst [vmem:[%s330 + $0x8] sm:$0xff] %v328
        %s333 = scalar_lea.vmem %s199, 32
        %v334 = vld [vmem:[%s333] sm:$0xff]
        %v335 = vld [vmem:[%s333 + $0x8] sm:$0xff]
        %336 = vmatpush.msra.mxu0 0.0
        %337 = vmatpush.msra.mxu0 0.0
        %338 = vmatpush.msra.mxu0 0.0
        %339 = vmatpush.msra.mxu0 0.0
        %340 = vmatpush.msra.mxu0 0.0
        %341 = vmatpush.msra.mxu0 0.0
        %342 = vmatpush.msra.mxu0 0.0
        %343 = vmatpush.msra.mxu0 0.0
        %344 = vmatpush.msra.mxu0 0.0
        %345 = vmatpush.msra.mxu0 0.0
        %346 = vmatpush.msra.mxu0 0.0
        %347 = vmatpush.msra.mxu0 0.0
        %348 = vmatpush.msra.mxu0 0.0
        %349 = vmatpush.msra.mxu0 0.0
        %350 = vmatpush.msra.mxu0 %v335
        %351 = vmatpush.msra.mxu0 %v334
        %352 = vmatmul.f32.gmra.mxu0 %v211
        %v353 = vpop.f32.mrf.mxu0
        %v354 = vadd.f32 0.0, %v353
        %355 = vmatmul.f32.gmra.mxu0 %v214
        %v356 = vpop.f32.mrf.mxu0
        %v357 = vadd.f32 0.0, %v356
        %358 = vdwg.mxu0
        %v360 = vsel %vm239, %v354, 0
        %v363 = vsel %vm239, %v357, 0
        %365 = vmatpush.msra.mxu0 0.0
        %366 = vmatpush.msra.mxu0 0.0
        %367 = vmatpush.msra.mxu0 0.0
        %368 = vmatpush.msra.mxu0 0.0
        %369 = vmatpush.msra.mxu0 0.0
        %370 = vmatpush.msra.mxu0 0.0
        %371 = vmatpush.msra.mxu0 0.0
        %372 = vmatpush.msra.mxu0 0.0
        %373 = vmatpush.msra.mxu0 0.0
        %374 = vmatpush.msra.mxu0 0.0
        %375 = vmatpush.msra.mxu0 0.0
        %376 = vmatpush.msra.mxu0 0.0
        %377 = vmatpush.msra.mxu0 0.0
        %378 = vmatpush.msra.mxu0 0.0
        %379 = vmatpush.msra.mxu0 0.0
        %380 = vmatpush.msra.mxu0 %v248
        %381 = vmatmul.f32.gmra.mxu0 %v360
        %v382 = vpop.f32.mrf.mxu0
        %v383 = vadd.f32 %v205, %v382
        %384 = vmatmul.f32.gmra.mxu0 %v363
        %v385 = vpop.f32.mrf.mxu0
        %v386 = vadd.f32 %v206, %v385
        %387 = vdwg.mxu0
        %s388 = scalar_lea.vmem %s193, 32 [#allocation2]
        %389 = vst [vmem:[%s388] sm:$0xff] %v383
        %390 = vst [vmem:[%s388 + $0x8] sm:$0xff] %v386
        %s391 = scalar_lea.vmem %s199, 48
        %v392 = vld [vmem:[%s391] sm:$0xff]
        %v393 = vld [vmem:[%s391 + $0x8] sm:$0xff]
        %394 = vmatpush.msra.mxu0 0.0
        %395 = vmatpush.msra.mxu0 0.0
        %396 = vmatpush.msra.mxu0 0.0
        %397 = vmatpush.msra.mxu0 0.0
        %398 = vmatpush.msra.mxu0 0.0
        %399 = vmatpush.msra.mxu0 0.0
        %400 = vmatpush.msra.mxu0 0.0
        %401 = vmatpush.msra.mxu0 0.0
        %402 = vmatpush.msra.mxu0 0.0
        %403 = vmatpush.msra.mxu0 0.0
        %404 = vmatpush.msra.mxu0 0.0
        %405 = vmatpush.msra.mxu0 0.0
        %406 = vmatpush.msra.mxu0 0.0
        %407 = vmatpush.msra.mxu0 0.0
        %408 = vmatpush.msra.mxu0 %v393
        %409 = vmatpush.msra.mxu0 %v392
        %410 = vmatmul.f32.gmra.mxu0 %v211
        %v411 = vpop.f32.mrf.mxu0
        %v412 = vadd.f32 0.0, %v411
        %413 = vmatmul.f32.gmra.mxu0 %v214
        %v414 = vpop.f32.mrf.mxu0
        %v415 = vadd.f32 0.0, %v414
        %416 = vdwg.mxu0
        %v418 = vsel %vm239, %v412, 0
        %v421 = vsel %vm239, %v415, 0
        %423 = vmatpush.msra.mxu0 0.0
        %424 = vmatpush.msra.mxu0 0.0
        %425 = vmatpush.msra.mxu0 0.0
        %426 = vmatpush.msra.mxu0 0.0
        %427 = vmatpush.msra.mxu0 0.0
        %428 = vmatpush.msra.mxu0 0.0
        %429 = vmatpush.msra.mxu0 0.0
        %430 = vmatpush.msra.mxu0 0.0
        %431 = vmatpush.msra.mxu0 0.0
        %432 = vmatpush.msra.mxu0 0.0
        %433 = vmatpush.msra.mxu0 0.0
        %434 = vmatpush.msra.mxu0 0.0
        %435 = vmatpush.msra.mxu0 0.0
        %436 = vmatpush.msra.mxu0 0.0
        %437 = vmatpush.msra.mxu0 0.0
        %438 = vmatpush.msra.mxu0 %v248
        %439 = vmatmul.f32.gmra.mxu0 %v418
        %v440 = vpop.f32.mrf.mxu0
        %v441 = vadd.f32 %v205, %v440
        %442 = vmatmul.f32.gmra.mxu0 %v421
        %v443 = vpop.f32.mrf.mxu0
        %v444 = vadd.f32 %v206, %v443
        %445 = vdwg.mxu0
        %s446 = scalar_lea.vmem %s193, 48 [#allocation2]
        %447 = vst [vmem:[%s446] sm:$0xff] %v441
        %448 = vst [vmem:[%s446 + $0x8] sm:$0xff] %v444
        %s449 = sand.u32 %s115, 1
        %s450 = scalar_lea.sflag [#allocation3], %s449
        %s451 = sand.u32 %s115, 1
        %s452 = smul.addr %s451, 64
        %s453 = scalar_lea.vmem [#allocation2], %s452
        // Predicated region
        $region37: #{tpu_custom_call.1} parent=35 // pred_check
          %p454 = pneg %p125
        $region38: #{tpu_custom_call.1} parent=35 // pred_check_branch
          %456 = sbr.rel (%p454) target = $region40
        $region39: #{tpu_custom_call.1} parent=35 // pred_region
          %s457 = smul.u32 4, %s18
          %459 = vsyncadd %s450, 0
          %s460 = smul.addr %s457, 2
          %s461 = smul.addr %s460, 8
          %s462 = scalar_lea.hbm %s4, %s461
          %s463 = sshll.u32 %s453, 4
          %s464 = int_to_ptr.vmem [resolvable:$true] %s463
          %s465 = sshll.u32 %s462, 4
          %s466 = int_to_ptr.hbm [resolvable:$true] %s465
          %471 = dma.vmem_to_hbm [thread:$0]  %s464, 1024, %s466, %s450, 128, 128, 8
        $region40: #{tpu_custom_call.1} parent=35 // pred_fallthru
          _
      $region36: #{tpu_custom_call.1} parent=5 // pred_fallthru
        _
      %p472 = scmp.le.s32.totalorder 2, %s13
      // Predicated region
      $region41: #{tpu_custom_call.1} parent=5 // pred_check
        %p473 = pneg %p472
      $region42: #{tpu_custom_call.1} parent=5 // pred_check_branch
        %475 = sbr.rel (%p473) target = $region44
      $region43: #{tpu_custom_call.1} parent=5 // pred_region
        %s476 = ssub.s32 %s13, 2
        // Predicated region
        $region45: #{tpu_custom_call.1} parent=43 // pred_check
          %p477 = pneg %p131
        $region46: #{tpu_custom_call.1} parent=43 // pred_check_branch
          %479 = sbr.rel (%p477) target = $region48
        $region47: #{tpu_custom_call.1} parent=43 // pred_region
          %s480 = sand.u32 %s116, 1
          %s481 = scalar_lea.sflag [#allocation3], %s480
          %s482 = sand.u32 %s116, 1
          %s483 = smul.addr %s482, 64
          %s484 = scalar_lea.vmem [#allocation2], %s483
          %486 = dma.done %s481, 1024
        $region48: #{tpu_custom_call.1} parent=43 // pred_fallthru
          _
      $region44: #{tpu_custom_call.1} parent=5 // pred_fallthru
        _
    $region6: #{tpu_custom_call.1} parent=1 // loop_footer
      %s17 = sadd.s32 1, %s13
    $region7: #{tpu_custom_call.1} parent=1 // loop_footer_branch
      %12 = sbr.rel target = $region3
    $region8: #{tpu_custom_call.1} parent=1 // loop_exit
      _
    %487 = vsyncpa [#allocation3], 1
    %s488 = scalar_lea.sflag [#allocation3], 1
    %489 = vsyncpa %s488, 1

// kernel: tpu_custom_call.1
$region0: #{tpu_custom_call.1}
  #allocation0 [shape = 'u32[]', space=smem, size = 0x4, offset = 0x4, fixed_abs, tag = 'smem constant byte address 0x4 - core index']
  #allocation1 [shape = 'u32[72,128]{1,0:T(1,128)}', space=vmem, size = 0x9000, scoped, tag = 'internal scratch']
  %s0 = inlined_call_operand.vmem [shape: f32[8,16,4], index: 0, kind: input, shape index: {}]
  %s1 = inlined_call_operand.vmem [shape: f32[16,16], index: 1, kind: input, shape index: {}]
  %s2 = inlined_call_operand.vmem [shape: f32[4,128], index: 2, kind: input, shape index: {}]
  %s3 = inlined_call_operand.vmem [shape: f32[16,128], index: 3, kind: input, shape index: {}]
  %s4 = inlined_call_operand.hbm [shape: f32[8,16,128], index: 4, kind: output, shape index: {}]
  %s5 = sld [smem:[#allocation0]]
  $region49: #{tpu_custom_call.1} parent=0
    _
  %s7 = ssub.s32 1, %s5
  %s8 = scalar_select 0, %s7, %s5
  $region1: #{tpu_custom_call.1} parent=0
    #allocation2 [shape = 'u8[65536]{0}', space=vmem, size = 0x10000, scoped, tag = 'output window, operand 0']
    #allocation3 [shape = 's32[2]{0}', space=sflag, size = 0x8, scoped, tag = 'scoped memory for tpu_custom_call.1']
    %9 = vsyncpa [#allocation3], 0
    %s10 = scalar_lea.sflag [#allocation3], 1
    %11 = vsyncpa %s10, 0
    loop: start=0, step=1, limit=4
    $region2: #{tpu_custom_call.1} parent=1 // loop_pre_header
      _
    $region3: #{tpu_custom_call.1} parent=1 // loop_header
      %s13 = sphi 0, %s17
      %p14 = scmp.ge.s32.totalorder %s13, 4
      %s23 = sphi 0, %s25
      %s26 = sphi 0, %s23
      %s27 = sphi 0, %s26
      %s43 = sphi 0, %s27
      %s47 = sphi 0, %s47
      %s49 = sphi 0, %s47
      %s50 = sphi 0, %s49
      %s64 = sphi 0, %s50
      %s68 = sphi 0, %s68
      %s70 = sphi 0, %s68
      %s71 = sphi 0, %s70
      %s85 = sphi 0, %s71
      %s89 = sphi 0, %s89
      %s91 = sphi 0, %s89
      %s92 = sphi 0, %s91
      %s106 = sphi 0, %s92
      %s112 = sphi 0, %s114
      %s115 = sphi 0, %s112
      %s116 = sphi 0, %s115
      %s132 = sphi 0, %s116
    $region4: #{tpu_custom_call.1} parent=1 // loop_header_branch
      %16 = sbr.rel (%p14) target = $region8
    $region5: #{tpu_custom_call.1} parent=1 // loop_body
      %s18 = ssub.s32 %s13, 1
      %s19 = ssub.s32 %s13, 2
      %s20 = sadd.s32 %s13, 1
      %s21 = ssub.s32 %s13, %s20
      %p22 = scmp.eq.s32.totalorder %s21, 0
      %s24 = sadd.s32 %s23, 1
      %s25 = scalar_select %p22, %s23, %s24
      %p28 = pneg %p22
      %p29 = scmp.eq.s32.totalorder %s13, 1
      %p30 = por %p28, %p29
      %p31 = scmp.ne.s32.totalorder %s23, %s26
      %p32 = scmp.eq.s32.totalorder %s13, 0
      %p33 = por %p31, %p32
      %p34 = scmp.ne.s32.totalorder %s23, %s26
      %p35 = scmp.eq.s32.totalorder %s18, 1
      %p36 = por %p34, %p35
      %p37 = scmp.ne.s32.totalorder %s26, %s27
      %p38 = scmp.eq.s32.totalorder %s18, 0
      %p39 = por %p37, %p38
      %p40 = scmp.ne.s32.totalorder %s26, %s27
      %p41 = scmp.eq.s32.totalorder %s19, 1
      %p42 = por %p40, %p41
      %p44 = scmp.ne.s32.totalorder %s27, %s43
      %p45 = scmp.eq.s32.totalorder %s19, 0
      %p46 = por %p44, %p45
      %s48 = sadd.s32 %s47, 1
      %p51 = scmp.eq.s32.totalorder %s13, 1
      %p52 = scmp.ne.s32.totalorder %s47, %s49
      %p53 = scmp.eq.s32.totalorder %s13, 0
      %p54 = por %p52, %p53
      %p55 = scmp.ne.s32.totalorder %s47, %s49
      %p56 = scmp.eq.s32.totalorder %s18, 1
      %p57 = por %p55, %p56
      %p58 = scmp.ne.s32.totalorder %s49, %s50
      %p59 = scmp.eq.s32.totalorder %s18, 0
      %p60 = por %p58, %p59
      %p61 = scmp.ne.s32.totalorder %s49, %s50
      %p62 = scmp.eq.s32.totalorder %s19, 1
      %p63 = por %p61, %p62
      %p65 = scmp.ne.s32.totalorder %s50, %s64
      %p66 = scmp.eq.s32.totalorder %s19, 0
      %p67 = por %p65, %p66
      %s69 = sadd.s32 %s68, 1
      %p72 = scmp.eq.s32.totalorder %s13, 1
      %p73 = scmp.ne.s32.totalorder %s68, %s70
      %p74 = scmp.eq.s32.totalorder %s13, 0
      %p75 = por %p73, %p74
      %p76 = scmp.ne.s32.totalorder %s68, %s70
      %p77 = scmp.eq.s32.totalorder %s18, 1
      %p78 = por %p76, %p77
      %p79 = scmp.ne.s32.totalorder %s70, %s71
      %p80 = scmp.eq.s32.totalorder %s18, 0
      %p81 = por %p79, %p80
      %p82 = scmp.ne.s32.totalorder %s70, %s71
      %p83 = scmp.eq.s32.totalorder %s19, 1
      %p84 = por %p82, %p83
      %p86 = scmp.ne.s32.totalorder %s71, %s85
      %p87 = scmp.eq.s32.totalorder %s19, 0
      %p88 = por %p86, %p87
      %s90 = sadd.s32 %s89, 1
      %p93 = scmp.eq.s32.totalorder %s13, 1
      %p94 = scmp.ne.s32.totalorder %s89, %s91
      %p95 = scmp.eq.s32.totalorder %s13, 0
      %p96 = por %p94, %p95
      %p97 = scmp.ne.s32.totalorder %s89, %s91
      %p98 = scmp.eq.s32.totalorder %s18, 1
      %p99 = por %p97, %p98
      %p100 = scmp.ne.s32.totalorder %s91, %s92
      %p101 = scmp.eq.s32.totalorder %s18, 0
      %p102 = por %p100, %p101
      %p103 = scmp.ne.s32.totalorder %s91, %s92
      %p104 = scmp.eq.s32.totalorder %s19, 1
      %p105 = por %p103, %p104
      %p107 = scmp.ne.s32.totalorder %s92, %s106
      %p108 = scmp.eq.s32.totalorder %s19, 0
      %p109 = por %p107, %p108
      %s110 = ssub.s32 %s13, %s20
      %p111 = scmp.eq.s32.totalorder %s110, 0
      %s113 = sadd.s32 %s112, 1
      %s114 = scalar_select %p111, %s112, %s113
      %p117 = pneg %p111
      %p118 = scmp.eq.s32.totalorder %s13, 1
      %p119 = por %p117, %p118
      %p120 = scmp.ne.s32.totalorder %s112, %s115
      %p121 = scmp.eq.s32.totalorder %s13, 0
      %p122 = por %p120, %p121
      %p123 = scmp.ne.s32.totalorder %s112, %s115
      %p124 = scmp.eq.s32.totalorder %s18, 1
      %p125 = por %p123, %p124
      %p126 = scmp.ne.s32.totalorder %s115, %s116
      %p127 = scmp.eq.s32.totalorder %s18, 0
      %p128 = por %p126, %p127
      %p129 = scmp.ne.s32.totalorder %s115, %s116
      %p130 = scmp.eq.s32.totalorder %s19, 1
      %p131 = por %p129, %p130
      %p133 = scmp.ne.s32.totalorder %s116, %s132
      %p134 = scmp.eq.s32.totalorder %s19, 0
      %p135 = por %p133, %p134
      %p136 = scmp.le.s32.totalorder 1, %s13
      %p137 = scmp.lt.s32.totalorder %s13, 3
      %p138 = pnand %p136, %p137
      %p139 = pneg %p138
      // Predicated region
      $region9: #{tpu_custom_call.1} parent=5 // pred_check
        _
      $region10: #{tpu_custom_call.1} parent=5 // pred_check_branch
        %141 = sbr.rel (%p138) target = $region12
      $region11: #{tpu_custom_call.1} parent=5 // pred_region
        %s142 = ssub.s32 %s13, 1
        // Predicated region
        $region13: #{tpu_custom_call.1} parent=11 // pred_check
          %p143 = pneg %p60
        $region14: #{tpu_custom_call.1} parent=11 // pred_check_branch
          %145 = sbr.rel (%p143) target = $region16
        $region15: #{tpu_custom_call.1} parent=11 // pred_region
          _
        $region16: #{tpu_custom_call.1} parent=11 // pred_fallthru
          _
        // Predicated region
        $region17: #{tpu_custom_call.1} parent=11 // pred_check
          %p146 = pneg %p81
        $region18: #{tpu_custom_call.1} parent=11 // pred_check_branch
          %148 = sbr.rel (%p146) target = $region20
        $region19: #{tpu_custom_call.1} parent=11 // pred_region
          _
        $region20: #{tpu_custom_call.1} parent=11 // pred_fallthru
          _
        // Predicated region
        $region21: #{tpu_custom_call.1} parent=11 // pred_check
          %p149 = pneg %p102
        $region22: #{tpu_custom_call.1} parent=11 // pred_check_branch
          %151 = sbr.rel (%p149) target = $region24
        $region23: #{tpu_custom_call.1} parent=11 // pred_region
          _
        $region24: #{tpu_custom_call.1} parent=11 // pred_fallthru
          _
      $region12: #{tpu_custom_call.1} parent=5 // pred_fallthru
        _
      %p152 = scmp.lt.s32.totalorder %s13, 2
      // Predicated region
      $region25: #{tpu_custom_call.1} parent=5 // pred_check
        %p153 = pneg %p152
      $region26: #{tpu_custom_call.1} parent=5 // pred_check_branch
        %155 = sbr.rel (%p153) target = $region28
      $region27: #{tpu_custom_call.1} parent=5 // pred_region
        // Predicated region
        $region29: #{tpu_custom_call.1} parent=27 // pred_check
          %p156 = pneg %p33
        $region30: #{tpu_custom_call.1} parent=27 // pred_check_branch
          %158 = sbr.rel (%p156) target = $region32
        $region31: #{tpu_custom_call.1} parent=27 // pred_region
          %s159 = smul.u32 4, %s13
          %p160 = scmp.lt.s32.totalorder %s159, 7
          %s161 = scalar_select %p160, %s159, 7
          %s162 = smul.addr %s161, 2
          %s163 = smul.addr %s162, 8
          %s164 = scalar_lea.vmem %s0, %s163
          %s165 = smul.u32 4, %s13
        $region32: #{tpu_custom_call.1} parent=27 // pred_fallthru
          _
      $region28: #{tpu_custom_call.1} parent=5 // pred_fallthru
        _
      %p166 = scmp.le.s32.totalorder 1, %s13
      %p167 = scmp.lt.s32.totalorder %s13, 3
      %p168 = pnand %p166, %p167
      %p169 = pneg %p168
      // Predicated region
      $region33: #{tpu_custom_call.1} parent=5 // pred_check
        _
      $region34: #{tpu_custom_call.1} parent=5 // pred_check_branch
        %171 = sbr.rel (%p168) target = $region36
      $region35: #{tpu_custom_call.1} parent=5 // pred_region
        %s172 = ssub.s32 %s13, 1
        %s173 = smul.u32 4, %s18
        %p174 = scmp.lt.s32.totalorder %s173, 7
        %s175 = scalar_select %p174, %s173, 7
        %s176 = smul.addr %s175, 2
        %s177 = smul.addr %s176, 8
        %s178 = scalar_lea.vmem %s0, %s177
        %p179 = pneg %p39
        %p180 = pneg %p36
        %p181 = pneg %p60
        %p182 = pneg %p57
        %p183 = pneg %p81
        %p184 = pneg %p78
        %p185 = pneg %p102
        %p186 = pneg %p99
        %p187 = pneg %p128
        %p188 = pneg %p125
        %s189 = sand.u32 %s115, 1
        %s190 = scalar_lea.sflag [#allocation3], %s189
        %s191 = sand.u32 %s115, 1
        %s192 = smul.addr %s191, 64
        %s193 = scalar_lea.vmem [#allocation2], %s192
        %s194 = smul.u32 4, %s18
        %p195 = scmp.lt.s32.totalorder %s194, 7
        %s196 = scalar_select %p195, %s194, 7
        %s197 = smul.addr %s196, 2
        %s198 = smul.addr %s197, 8
        %s199 = scalar_lea.vmem %s0, %s198
        %s200 = smul.u32 4, %s18
        %s201 = smul.u32 4, %s18
        %v202 = vld [vmem:[%s1] sm:$0xff]
        %v203 = vld [vmem:[%s1 + $0x8] sm:$0xff]
        %v204 = vld [vmem:[%s2] sm:$0xf]
        %v205 = vld [vmem:[%s3] sm:$0xff]
        %v206 = vld [vmem:[%s3 + $0x8] sm:$0xff]
        %v207 = vld [vmem:[%s199] sm:$0xff]
        %v208 = vld [vmem:[%s199 + $0x8] sm:$0xff]
        %vm209 = vcmask 130048
        %v211 = vsel %vm209, %v202, 0
        %v214 = vsel %vm209, %v203, 0
        %216 = vmatpush.msra.mxu0 0.0
        %217 = vmatpush.msra.mxu0 0.0
        %218 = vmatpush.msra.mxu0 0.0
        %219 = vmatpush.msra.mxu0 0.0
        %220 = vmatpush.msra.mxu0 0.0
        %221 = vmatpush.msra.mxu0 0.0
        %222 = vmatpush.msra.mxu0 0.0
        %223 = vmatpush.msra.mxu0 0.0
        %224 = vmatpush.msra.mxu0 0.0
        %225 = vmatpush.msra.mxu0 0.0
        %226 = vmatpush.msra.mxu0 0.0
        %227 = vmatpush.msra.mxu0 0.0
        %228 = vmatpush.msra.mxu0 0.0
        %229 = vmatpush.msra.mxu0 0.0
        %230 = vmatpush.msra.mxu0 %v208
        %231 = vmatpush.msra.mxu0 %v207
        %232 = vmatmul.f32.gmra.mxu0 %v211
        %v233 = vpop.f32.mrf.mxu0
        %v234 = vadd.f32 0.0, %v233
        %235 = vmatmul.f32.gmra.mxu0 %v214
        %v236 = vpop.f32.mrf.mxu0
        %v237 = vadd.f32 0.0, %v236
        %238 = vdwg.mxu0
        %vm239 = vcmask 31744
        %v241 = vsel %vm239, %v234, 0
        %v244 = vsel %vm239, %v237, 0
        %vm246 = vcmask 1043456
        %v248 = vsel %vm246, %v204, 0
        %250 = vmatpush.msra.mxu0 0.0
        %251 = vmatpush.msra.mxu0 0.0
        %252 = vmatpush.msra.mxu0 0.0
        %253 = vmatpush.msra.mxu0 0.0
        %254 = vmatpush.msra.mxu0 0.0
        %255 = vmatpush.msra.mxu0 0.0
        %256 = vmatpush.msra.mxu0 0.0
        %257 = vmatpush.msra.mxu0 0.0
        %258 = vmatpush.msra.mxu0 0.0
        %259 = vmatpush.msra.mxu0 0.0
        %260 = vmatpush.msra.mxu0 0.0
        %261 = vmatpush.msra.mxu0 0.0
        %262 = vmatpush.msra.mxu0 0.0
        %263 = vmatpush.msra.mxu0 0.0
        %264 = vmatpush.msra.mxu0 0.0
        %265 = vmatpush.msra.mxu0 %v248
        %266 = vmatmul.f32.gmra.mxu0 %v241
        %v267 = vpop.f32.mrf.mxu0
        %v268 = vadd.f32 %v205, %v267
        %269 = vmatmul.f32.gmra.mxu0 %v244
        %v270 = vpop.f32.mrf.mxu0
        %v271 = vadd.f32 %v206, %v270
        %272 = vdwg.mxu0
        %273 = vst [vmem:[%s193] sm:$0xff] %v268
        %274 = vst [vmem:[%s193 + $0x8] sm:$0xff] %v271
        %s275 = scalar_lea.vmem %s199, 16
        %v276 = vld [vmem:[%s275] sm:$0xff]
        %v277 = vld [vmem:[%s275 + $0x8] sm:$0xff]
        %278 = vmatpush.msra.mxu0 0.0
        %279 = vmatpush.msra.mxu0 0.0
        %280 = vmatpush.msra.mxu0 0.0
        %281 = vmatpush.msra.mxu0 0.0
        %282 = vmatpush.msra.mxu0 0.0
        %283 = vmatpush.msra.mxu0 0.0
        %284 = vmatpush.msra.mxu0 0.0
        %285 = vmatpush.msra.mxu0 0.0
        %286 = vmatpush.msra.mxu0 0.0
        %287 = vmatpush.msra.mxu0 0.0
        %288 = vmatpush.msra.mxu0 0.0
        %289 = vmatpush.msra.mxu0 0.0
        %290 = vmatpush.msra.mxu0 0.0
        %291 = vmatpush.msra.mxu0 0.0
        %292 = vmatpush.msra.mxu0 %v277
        %293 = vmatpush.msra.mxu0 %v276
        %294 = vmatmul.f32.gmra.mxu0 %v211
        %v295 = vpop.f32.mrf.mxu0
        %v296 = vadd.f32 0.0, %v295
        %297 = vmatmul.f32.gmra.mxu0 %v214
        %v298 = vpop.f32.mrf.mxu0
        %v299 = vadd.f32 0.0, %v298
        %300 = vdwg.mxu0
        %v302 = vsel %vm239, %v296, 0
        %v305 = vsel %vm239, %v299, 0
        %307 = vmatpush.msra.mxu0 0.0
        %308 = vmatpush.msra.mxu0 0.0
        %309 = vmatpush.msra.mxu0 0.0
        %310 = vmatpush.msra.mxu0 0.0
        %311 = vmatpush.msra.mxu0 0.0
        %312 = vmatpush.msra.mxu0 0.0
        %313 = vmatpush.msra.mxu0 0.0
        %314 = vmatpush.msra.mxu0 0.0
        %315 = vmatpush.msra.mxu0 0.0
        %316 = vmatpush.msra.mxu0 0.0
        %317 = vmatpush.msra.mxu0 0.0
        %318 = vmatpush.msra.mxu0 0.0
        %319 = vmatpush.msra.mxu0 0.0
        %320 = vmatpush.msra.mxu0 0.0
        %321 = vmatpush.msra.mxu0 0.0
        %322 = vmatpush.msra.mxu0 %v248
        %323 = vmatmul.f32.gmra.mxu0 %v302
        %v324 = vpop.f32.mrf.mxu0
        %v325 = vadd.f32 %v205, %v324
        %326 = vmatmul.f32.gmra.mxu0 %v305
        %v327 = vpop.f32.mrf.mxu0
        %v328 = vadd.f32 %v206, %v327
        %329 = vdwg.mxu0
        %s330 = scalar_lea.vmem %s193, 16 [#allocation2]
        %331 = vst [vmem:[%s330] sm:$0xff] %v325
        %332 = vst [vmem:[%s330 + $0x8] sm:$0xff] %v328
        %s333 = scalar_lea.vmem %s199, 32
        %v334 = vld [vmem:[%s333] sm:$0xff]
        %v335 = vld [vmem:[%s333 + $0x8] sm:$0xff]
        %336 = vmatpush.msra.mxu0 0.0
        %337 = vmatpush.msra.mxu0 0.0
        %338 = vmatpush.msra.mxu0 0.0
        %339 = vmatpush.msra.mxu0 0.0
        %340 = vmatpush.msra.mxu0 0.0
        %341 = vmatpush.msra.mxu0 0.0
        %342 = vmatpush.msra.mxu0 0.0
        %343 = vmatpush.msra.mxu0 0.0
        %344 = vmatpush.msra.mxu0 0.0
        %345 = vmatpush.msra.mxu0 0.0
        %346 = vmatpush.msra.mxu0 0.0
        %347 = vmatpush.msra.mxu0 0.0
        %348 = vmatpush.msra.mxu0 0.0
        %349 = vmatpush.msra.mxu0 0.0
        %350 = vmatpush.msra.mxu0 %v335
        %351 = vmatpush.msra.mxu0 %v334
        %352 = vmatmul.f32.gmra.mxu0 %v211
        %v353 = vpop.f32.mrf.mxu0
        %v354 = vadd.f32 0.0, %v353
        %355 = vmatmul.f32.gmra.mxu0 %v214
        %v356 = vpop.f32.mrf.mxu0
        %v357 = vadd.f32 0.0, %v356
        %358 = vdwg.mxu0
        %v360 = vsel %vm239, %v354, 0
        %v363 = vsel %vm239, %v357, 0
        %365 = vmatpush.msra.mxu0 0.0
        %366 = vmatpush.msra.mxu0 0.0
        %367 = vmatpush.msra.mxu0 0.0
        %368 = vmatpush.msra.mxu0 0.0
        %369 = vmatpush.msra.mxu0 0.0
        %370 = vmatpush.msra.mxu0 0.0
        %371 = vmatpush.msra.mxu0 0.0
        %372 = vmatpush.msra.mxu0 0.0
        %373 = vmatpush.msra.mxu0 0.0
        %374 = vmatpush.msra.mxu0 0.0
        %375 = vmatpush.msra.mxu0 0.0
        %376 = vmatpush.msra.mxu0 0.0
        %377 = vmatpush.msra.mxu0 0.0
        %378 = vmatpush.msra.mxu0 0.0
        %379 = vmatpush.msra.mxu0 0.0
        %380 = vmatpush.msra.mxu0 %v248
        %381 = vmatmul.f32.gmra.mxu0 %v360
        %v382 = vpop.f32.mrf.mxu0
        %v383 = vadd.f32 %v205, %v382
        %384 = vmatmul.f32.gmra.mxu0 %v363
        %v385 = vpop.f32.mrf.mxu0
        %v386 = vadd.f32 %v206, %v385
        %387 = vdwg.mxu0
        %s388 = scalar_lea.vmem %s193, 32 [#allocation2]
        %389 = vst [vmem:[%s388] sm:$0xff] %v383
        %390 = vst [vmem:[%s388 + $0x8] sm:$0xff] %v386
        %s391 = scalar_lea.vmem %s199, 48
        %v392 = vld [vmem:[%s391] sm:$0xff]
        %v393 = vld [vmem:[%s391 + $0x8] sm:$0xff]
        %394 = vmatpush.msra.mxu0 0.0
        %395 = vmatpush.msra.mxu0 0.0
        %396 = vmatpush.msra.mxu0 0.0
        %397 = vmatpush.msra.mxu0 0.0
        %398 = vmatpush.msra.mxu0 0.0
        %399 = vmatpush.msra.mxu0 0.0
        %400 = vmatpush.msra.mxu0 0.0
        %401 = vmatpush.msra.mxu0 0.0
        %402 = vmatpush.msra.mxu0 0.0
        %403 = vmatpush.msra.mxu0 0.0
        %404 = vmatpush.msra.mxu0 0.0
        %405 = vmatpush.msra.mxu0 0.0
        %406 = vmatpush.msra.mxu0 0.0
        %407 = vmatpush.msra.mxu0 0.0
        %408 = vmatpush.msra.mxu0 %v393
        %409 = vmatpush.msra.mxu0 %v392
        %410 = vmatmul.f32.gmra.mxu0 %v211
        %v411 = vpop.f32.mrf.mxu0
        %v412 = vadd.f32 0.0, %v411
        %413 = vmatmul.f32.gmra.mxu0 %v214
        %v414 = vpop.f32.mrf.mxu0
        %v415 = vadd.f32 0.0, %v414
        %416 = vdwg.mxu0
        %v418 = vsel %vm239, %v412, 0
        %v421 = vsel %vm239, %v415, 0
        %423 = vmatpush.msra.mxu0 0.0
        %424 = vmatpush.msra.mxu0 0.0
        %425 = vmatpush.msra.mxu0 0.0
        %426 = vmatpush.msra.mxu0 0.0
        %427 = vmatpush.msra.mxu0 0.0
        %428 = vmatpush.msra.mxu0 0.0
        %429 = vmatpush.msra.mxu0 0.0
        %430 = vmatpush.msra.mxu0 0.0
        %431 = vmatpush.msra.mxu0 0.0
        %432 = vmatpush.msra.mxu0 0.0
        %433 = vmatpush.msra.mxu0 0.0
        %434 = vmatpush.msra.mxu0 0.0
        %435 = vmatpush.msra.mxu0 0.0
        %436 = vmatpush.msra.mxu0 0.0
        %437 = vmatpush.msra.mxu0 0.0
        %438 = vmatpush.msra.mxu0 %v248
        %439 = vmatmul.f32.gmra.mxu0 %v418
        %v440 = vpop.f32.mrf.mxu0
        %v441 = vadd.f32 %v205, %v440
        %442 = vmatmul.f32.gmra.mxu0 %v421
        %v443 = vpop.f32.mrf.mxu0
        %v444 = vadd.f32 %v206, %v443
        %445 = vdwg.mxu0
        %s446 = scalar_lea.vmem %s193, 48 [#allocation2]
        %447 = vst [vmem:[%s446] sm:$0xff] %v441
        %448 = vst [vmem:[%s446 + $0x8] sm:$0xff] %v444
        %s449 = sand.u32 %s115, 1
        %s450 = scalar_lea.sflag [#allocation3], %s449
        %s451 = sand.u32 %s115, 1
        %s452 = smul.addr %s451, 64
        %s453 = scalar_lea.vmem [#allocation2], %s452
        // Predicated region
        $region37: #{tpu_custom_call.1} parent=35 // pred_check
          %p454 = pneg %p125
        $region38: #{tpu_custom_call.1} parent=35 // pred_check_branch
          %456 = sbr.rel (%p454) target = $region40
        $region39: #{tpu_custom_call.1} parent=35 // pred_region
          %s457 = smul.u32 4, %s18
          %459 = vsyncadd %s450, 0
          %s460 = smul.addr %s457, 2
          %s461 = smul.addr %s460, 8
          %s462 = scalar_lea.hbm %s4, %s461
          %s463 = sshll.u32 %s453, 4
          %s464 = int_to_ptr.vmem [resolvable:$true] %s463
          %s465 = sshll.u32 %s462, 4
          %s466 = int_to_ptr.hbm [resolvable:$true] %s465
          %471 = dma.vmem_to_hbm [thread:$0]  %s464, 1024, %s466, %s450, 128, 128, 8
        $region40: #{tpu_custom_call.1} parent=35 // pred_fallthru
          _
      $region36: #{tpu_custom_call.1} parent=5 // pred_fallthru
        _
      %p472 = scmp.le.s32.totalorder 2, %s13
      // Predicated region
      $region41: #{tpu_custom_call.1} parent=5 // pred_check
        %p473 = pneg %p472
      $region42: #{tpu_custom_call.1} parent=5 // pred_check_branch
        %475 = sbr.rel (%p473) target = $region44
      $region43: #{tpu_custom_call.1} parent=5 // pred_region
        %s476 = ssub.s32 %s13, 2
        // Predicated region
        $region45: #{tpu_custom_call.1} parent=43 // pred_check
          %p477 = pneg %p131
        $region46: #{tpu_custom_call.1} parent=43 // pred_check_branch
          %479 = sbr.rel (%p477) target = $region48
        $region47: #{tpu_custom_call.1} parent=43 // pred_region
          %s480 = sand.u32 %s116, 1
          %s481 = scalar_lea.sflag [#allocation3], %s480
          %s482 = sand.u32 %s116, 1
          %s483 = smul.addr %s482, 64
          %s484 = scalar_lea.vmem [#allocation2], %s483
          %486 = dma.done %s481, 1024
        $region48: #{tpu_custom_call.1} parent=43 // pred_fallthru
          _
      $region44: #{tpu_custom_call.1} parent=5 // pred_fallthru
        _
    $region6: #{tpu_custom_call.1} parent=1 // loop_footer
      %s17 = sadd.s32 1, %s13
    $region7: #{tpu_custom_call.1} parent=1 // loop_footer_branch
      %12 = sbr.rel target = $region3
    $region8: #{tpu_custom_call.1} parent=1 // loop_exit
      _
    %487 = vsyncpa [#allocation3], 1
    %s488 = scalar_lea.sflag [#allocation3], 1
    %489 = vsyncpa %s488, 1

</llo_original>
